<compile_context>
chip_gen: v7x
topology: tpu7x:2x2x1
jax: 0.10.0
libtpu: 0.0.40
codegen_flags: <defaults>
</compile_context>

<pallas_src>
import functools

import jax
import jax.numpy as jnp
from jax.experimental import pallas as pl
from jax.experimental.pallas import tpu as pltpu


def _round_up(a, b):
    return ((a + b - 1) // b) * b


def _cdiv(a, b):
    return (a + b - 1) // b


def _tpu_vmem_bytes():
    # Python-time hardware query; fall back to the smallest budget (v7x: 64 MiB)
    # so the defaults are safe on any generation.
    try:
        return int(pltpu.get_tpu_info().vmem_capacity_bytes)
    except Exception:
        return 64 * 1024 * 1024


_VMEM_CAP = _tpu_vmem_bytes()
# Scoped-VMEM budget requested from the compiler (~75% of physical, <= 96 MiB).
_VMEM_BUDGET = int(min(96 * 1024 * 1024, (_VMEM_CAP * 3) // 4))
# Default row tile: bigger on 128 MiB chips (v5e/v6e), conservative on v7x/unknown.
_DEFAULT_TM = 2048 if _VMEM_CAP >= 100 * 1024 * 1024 else 1024
_DEFAULT_TN = 1024


def _kmeans_dist_kernel(x_ref, c_ref, cnorm_ref, out_ref, xnorm_ref):
    # x_ref:     (tm, D)   tile of rows (native dtype; bf16 stays bf16)
    # c_ref:     (D, tn)   tile of cluster centers (same dtype as x; resident in VMEM)
    # cnorm_ref: (1, tn)   f32 squared norms of those centers
    # out_ref:   (tm, tn)  squared distances
    # xnorm_ref: (tm, 1)   f32 scratch: ||x||^2 per row, computed once per row tile

    # Row norms only on the first K tile of each row tile: square in the native
    # dtype (bf16 VALU on v6e/v7x), accumulate the reduction in f32.
    @pl.when(pl.program_id(1) == 0)
    def _():
        xs = x_ref[...]
        xnorm_ref[...] = jnp.sum((xs * xs).astype(jnp.float32), axis=-1,
                                 keepdims=True)

    # x @ C on the MXU with matched (narrow) operand dtypes; f32 accumulation.
    xc = jnp.dot(x_ref[...], c_ref[...], preferred_element_type=jnp.float32)

    dist = xnorm_ref[...] - 2.0 * xc + cnorm_ref[...]
    out_ref[...] = dist.astype(out_ref.dtype)


@functools.partial(jax.jit, static_argnames=("tm", "tn"))
def kmeans_dist(x, C, Cnorm, *, tm=_DEFAULT_TM, tn=_DEFAULT_TN):
    """Squared-distance matrix to k-means centers.

    x:     (..., D) float (e.g. (B, L, D) or (L, D))
    C:     (D, K)   float (centers transposed, as in the PyTorch module)
    Cnorm: (1, K)   float
    returns (..., K) in x.dtype
    """
    *lead, D = x.shape
    K = C.shape[1]
    M = 1
    for s in lead:
        M *= s
    x2d = x.reshape(M, D)

    x_dtype = jnp.dtype(x.dtype)
    itemsize = x_dtype.itemsize

    # ---- K tiling: one large lane-dense column tile; pad only the tiny center
    # tensors up to a tile multiple (the output itself is NOT padded). ----
    tn_eff = min(_round_up(tn, 128), _round_up(K, 128))
    Kpad = _round_up(K, tn_eff)
    Cp = C.astype(x_dtype)            # match MXU operand dtypes (bf16 path stays bf16)
    Cnp = Cnorm.astype(jnp.float32)   # epilogue math is f32; hoist cast out of kernel
    if Kpad != K:
        Cp = jnp.pad(Cp, ((0, 0), (0, Kpad - K)))
        Cnp = jnp.pad(Cnp, ((0, 0), (0, Kpad - K)))

    # ---- Row tiling. ----
    row_mult = 8 if itemsize >= 4 else 16   # (8,128) f32 tile vs (16,128) packed bf16
    tm_eff = min(tm, _round_up(M, row_mult))
    if M >= 512 and _cdiv(M, tm_eff) <= 2:
        # Keep >= 2 roughly balanced row tiles so the megacore "parallel" axis
        # actually uses both TensorCores.
        tm_eff = min(tm_eff, _round_up(_cdiv(M, 2), 256))

    # Shrink the row tile until the (double-buffered) working set fits the budget.
    def _footprint(tm_):
        return (2 * tm_ * D * itemsize            # x            (double-buffered)
                + 2 * tm_ * tn_eff * itemsize     # out          (double-buffered)
                + 2 * D * tn_eff * itemsize       # C            (resident, 2 bufs)
                + 2 * 8 * tn_eff * 4              # Cnorm        (sublane padded)
                + tm_ * 128 * 4)                  # ||x||^2 scratch (lane padded)

    while tm_eff > row_mult and _footprint(tm_eff) > _VMEM_BUDGET:
        tm_eff = max(row_mult, _round_up(tm_eff // 2, row_mult))

    grid = (_cdiv(M, tm_eff), Kpad // tn_eff)

    out = pl.pallas_call(
        _kmeans_dist_kernel,
        # Exact (M, K) output: partial last M / K blocks are masked stores, so no
        # post-kernel [:, :K] slice (which would re-read/re-write the whole output).
        out_shape=jax.ShapeDtypeStruct((M, K), x_dtype),
        grid_spec=pltpu.PrefetchScalarGridSpec(
            num_scalar_prefetch=0,
            grid=grid,
            in_specs=[
                # x rows: block index only depends on i -> fetched once per row tile.
                pl.BlockSpec((tm_eff, D), lambda i, j: (i, 0)),
                # Centers / norms: constant along the row grid -> resident in VMEM,
                # not re-streamed from HBM per row tile.
                pl.BlockSpec((D, tn_eff), lambda i, j: (0, j)),
                pl.BlockSpec((1, tn_eff), lambda i, j: (0, j)),
            ],
            out_specs=pl.BlockSpec((tm_eff, tn_eff), lambda i, j: (i, j)),
            scratch_shapes=[pltpu.VMEM((tm_eff, 1), jnp.float32)],
        ),
        compiler_params=pltpu.CompilerParams(
            # Row tiles are independent (megacore-shardable); the K axis carries the
            # xnorm scratch, so it stays sequential on a core.
            dimension_semantics=("parallel", "arbitrary"),
            vmem_limit_bytes=_VMEM_BUDGET,
        ),
    )(x2d, Cp, Cnp)

    return out.reshape(*lead, K)


def reference_dist(x, C, Cnorm):
    return jnp.sum(x * x, axis=-1, keepdims=True) - 2.0 * jnp.matmul(x, C) + Cnorm


if __name__ == "__main__":
    key = jax.random.PRNGKey(0)
    k_x, k_c = jax.random.split(key)

    B, L, D, K = 2, 8, 32, 128  # batch x seq x feature-dim, K clusters

    x = jax.random.normal(k_x, (B, L, D), dtype=jnp.float32)

    # Deterministic synthetic "k-means model": centers (K, D) -> C = centers.T (D, K)
    # TODO(synk): joblib.load of a trained sklearn k-means model has no in-kernel
    # equivalent; centers are synthesized here.
    centers = jax.random.normal(k_c, (K, D), dtype=jnp.float32)
    C = centers.T                                   # (D, K)
    Cnorm = jnp.sum(C * C, axis=0, keepdims=True)   # (1, K)

    dist = kmeans_dist(x, C, Cnorm)
    jax.block_until_ready(dist)
    ref = reference_dist(x, C, Cnorm)
    assert dist.shape == (B, L, K)
    assert jnp.allclose(dist, ref, atol=1e-3, rtol=1e-3)

    # Sanity check the masked-store (no K padding slice) path with K not a
    # multiple of 128.
    K2 = 100
    C2 = C[:, :K2]
    Cnorm2 = jnp.sum(C2 * C2, axis=0, keepdims=True)
    dist2 = kmeans_dist(x, C2, Cnorm2)
    jax.block_until_ready(dist2)
    ref2 = reference_dist(x, C2, Cnorm2)
    assert dist2.shape == (B, L, K2)
    assert jnp.allclose(dist2, ref2, atol=1e-3, rtol=1e-3)

    print("KERNEL_OK")
</pallas_src>

<mosaic_0001>
module attributes {stable_mosaic.version = 11 : i64} {
  func.func @_kmeans_dist_kernel(%arg0: i32, %arg1: i32, %arg2: memref<16x32xf32, #tpu.memory_space<vmem>>, %arg3: memref<32x128xf32, #tpu.memory_space<vmem>>, %arg4: memref<1x128xf32, #tpu.memory_space<vmem>>, %arg5: memref<16x128xf32, #tpu.memory_space<vmem>>, %arg6: memref<16x1xf32, #tpu.memory_space<vmem>>) attributes {dimension_semantics = [#tpu.dimension_semantics<parallel>, #tpu.dimension_semantics<arbitrary>], iteration_bounds = array<i64: 1, 1>, scalar_prefetch = 0 : i64, scratch_operands = 1 : i64, tpu.core_type = #tpu.core_type<tc>, window_params = [{transform_indices = @transform_0, window_bounds = array<i64: 16, 32>}, {transform_indices = @transform_1, window_bounds = array<i64: 32, 128>}, {transform_indices = @transform_2, window_bounds = array<i64: 1, 128>}, {transform_indices = @transform_3, window_bounds = array<i64: 16, 128>}]} {
    %c0_i32 = arith.constant 0 : i32
    %0 = arith.cmpi eq, %arg1, %c0_i32 : i32
    %1 = arith.extui %0 : i1 to i32
    %c0_i32_0 = arith.constant 0 : i32
    %2 = arith.cmpi ne, %1, %c0_i32_0 : i32
    scf.if %2 {
      %c0_11 = arith.constant 0 : index
      %c0_12 = arith.constant 0 : index
      %15 = vector.load %arg2[%c0_11, %c0_12] : memref<16x32xf32, #tpu.memory_space<vmem>>, vector<16x32xf32>
      %16 = arith.mulf %15, %15 : vector<16x32xf32>
      %cst_13 = arith.constant dense<0.000000e+00> : vector<16xf32>
      %17 = vector.multi_reduction <add>, %16, %cst_13 [1] : vector<16x32xf32> to vector<16xf32>
      %18 = vector.shape_cast %17 : vector<16xf32> to vector<16x1xf32>
      %c0_14 = arith.constant 0 : index
      %c0_15 = arith.constant 0 : index
      %19 = vector.load %arg6[%c0_14, %c0_15] : memref<16x1xf32, #tpu.memory_space<vmem>>, vector<16x1xf32>
      tpu.vector_store %arg6[%c0_14, %c0_15], %18 {strides = array<i32>} : memref<16x1xf32, #tpu.memory_space<vmem>>, vector<16x1xf32>,
    } else {
    }
    %c0 = arith.constant 0 : index
    %c0_1 = arith.constant 0 : index
    %3 = vector.load %arg2[%c0, %c0_1] : memref<16x32xf32, #tpu.memory_space<vmem>>, vector<16x32xf32>
    %c0_2 = arith.constant 0 : index
    %c0_3 = arith.constant 0 : index
    %4 = vector.load %arg3[%c0_2, %c0_3] : memref<32x128xf32, #tpu.memory_space<vmem>>, vector<32x128xf32>
    %cst = arith.constant dense<0.000000e+00> : vector<16x128xf32>
    %5 = tpu.matmul %3, %4, %cst {dimension_numbers = #tpu.dot_dimension_numbers<[1], [0], [0], [1], [0, 0, 1, 1], [], []>} : vector<16x32xf32>, vector<32x128xf32>, vector<16x128xf32> -> vector<16x128xf32>
    %c0_4 = arith.constant 0 : index
    %c0_5 = arith.constant 0 : index
    %6 = vector.load %arg6[%c0_4, %c0_5] : memref<16x1xf32, #tpu.memory_space<vmem>>, vector<16x1xf32>
    %cst_6 = arith.constant 2.000000e+00 : f32
    %7 = vector.broadcast %cst_6 : f32 to vector<16x128xf32>
    %8 = arith.mulf %7, %5 : vector<16x128xf32>
    %9 = vector.broadcast %6 : vector<16x1xf32> to vector<16x128xf32>
    %10 = arith.subf %9, %8 : vector<16x128xf32>
    %c0_7 = arith.constant 0 : index
    %c0_8 = arith.constant 0 : index
    %11 = vector.load %arg4[%c0_7, %c0_8] : memref<1x128xf32, #tpu.memory_space<vmem>>, vector<1x128xf32>
    %12 = vector.broadcast %11 : vector<1x128xf32> to vector<16x128xf32>
    %13 = arith.addf %10, %12 : vector<16x128xf32>
    %c0_9 = arith.constant 0 : index
    %c0_10 = arith.constant 0 : index
    %14 = vector.load %arg5[%c0_9, %c0_10] : memref<16x128xf32, #tpu.memory_space<vmem>>, vector<16x128xf32>
    tpu.vector_store %arg5[%c0_9, %c0_10], %13 {strides = array<i32>} : memref<16x128xf32, #tpu.memory_space<vmem>>, vector<16x128xf32>,
    return
  }
  func.func @transform_0(%arg0: i32, %arg1: i32) -> (i32, i32) {
    %c0_i32 = arith.constant 0 : i32
    %c0_i32_0 = arith.constant 0 : i32
    return %arg0, %c0_i32 : i32, i32
  }
  func.func @transform_1(%arg0: i32, %arg1: i32) -> (i32, i32) {
    %c0_i32 = arith.constant 0 : i32
    %c0_i32_0 = arith.constant 0 : i32
    return %c0_i32, %arg1 : i32, i32
  }
  func.func @transform_2(%arg0: i32, %arg1: i32) -> (i32, i32) {
    %c0_i32 = arith.constant 0 : i32
    %c0_i32_0 = arith.constant 0 : i32
    return %c0_i32, %arg1 : i32, i32
  }
  func.func @transform_3(%arg0: i32, %arg1: i32) -> (i32, i32) {
    %c0_i32 = arith.constant 0 : i32
    return %arg0, %arg1 : i32, i32
  }
}

</mosaic_0001>

<llo_original>
// kernel: kmeans_dist.1
$region0: #{kmeans_dist.1}
  #allocation0 [shape = 'u32[]', space=smem, size = 0x4, offset = 0x4, fixed_abs, tag = 'smem constant byte address 0x4 - core index']
  #allocation1 [shape = 'u32[144,128]{1,0:T(1,128)}', space=vmem, size = 0x12000, scoped, tag = 'internal scratch']
  #allocation2 [shape = 'f32[16,1]{1,0:T(8,128)}', space=vmem, size = 0x2000, scoped, tag = 'scratch operand']
  %s0 = inlined_call_operand.hbm [shape: f32[16,32], index: 0, kind: input, shape index: {}]
  %s1 = inlined_call_operand.hbm [shape: f32[32,128], index: 1, kind: input, shape index: {}]
  %s2 = inlined_call_operand.vmem [shape: f32[1,128], index: 2, kind: input, shape index: {}]
  %s3 = inlined_call_operand.hbm [shape: f32[16,128], index: 3, kind: output, shape index: {}]
  %s4 = sld [smem:[#allocation0]]
  $region34: #{kmeans_dist.1} parent=0
    _
  %s6 = ssub.s32 1, %s4
  %s7 = scalar_select 0, %s6, %s4
  $region1: #{kmeans_dist.1} parent=0
    #allocation3 [shape = 'u8[8192]{0}', space=vmem, size = 0x2000, scoped, tag = 'input window, operand 0, single buffered']
    #allocation4 [shape = 's32[1]{0}', space=sflag, size = 0x4, scoped, tag = 'scoped memory for kmeans_dist.1']
    #allocation5 [shape = 's32[1]{0}', space=sflag, size = 0x4, scoped, tag = 'scoped memory for kmeans_dist.1']
    #allocation6 [shape = 'u8[16384]{0}', space=vmem, size = 0x4000, scoped, tag = 'input window, operand 1, single buffered']
    #allocation7 [shape = 's32[1]{0}', space=sflag, size = 0x4, scoped, tag = 'scoped memory for kmeans_dist.1']
    #allocation8 [shape = 'u8[8192]{0}', space=vmem, size = 0x2000, scoped, tag = 'output window, operand 0, single buffered']
    %8 = vsyncpa [#allocation4], 0
    %9 = vsyncpa [#allocation7], 0
    %10 = vsyncpa [#allocation5], 0
    // Predicated region
    $region2: #{kmeans_dist.1} parent=1 // pred_check
      _
    $region3: #{kmeans_dist.1} parent=1 // pred_check_branch
      %12 = sbr.rel (0) target = $region5
    $region4: #{kmeans_dist.1} parent=1 // pred_region
      %s14 = ssub.s32 256, 256
      %15 = vsyncadd [#allocation4], %s14
      %s16 = sshll.u32 [#allocation3], 4
      %s17 = int_to_ptr.vmem [resolvable:$true] %s16
      %22 = dma.hbm_to_vmem [thread:$0]  %s0, 256, %s17, [#allocation4], 128, 128, 8
    $region5: #{kmeans_dist.1} parent=1 // pred_fallthru
      _
    // Predicated region
    $region6: #{kmeans_dist.1} parent=1 // pred_check
      _
    $region7: #{kmeans_dist.1} parent=1 // pred_check_branch
      %24 = sbr.rel (0) target = $region9
    $region8: #{kmeans_dist.1} parent=1 // pred_region
      %s26 = ssub.s32 512, 512
      %27 = vsyncadd [#allocation7], %s26
      %s28 = sshll.u32 [#allocation6], 4
      %s29 = int_to_ptr.vmem [resolvable:$true] %s28
      %34 = dma.hbm_to_vmem [thread:$0]  %s1, 512, %s29, [#allocation7], 128, 128, 8
    $region9: #{kmeans_dist.1} parent=1 // pred_fallthru
      _
    // Predicated region
    $region10: #{kmeans_dist.1} parent=1 // pred_check
      _
    $region11: #{kmeans_dist.1} parent=1 // pred_check_branch
      %36 = sbr.rel (0) target = $region13
    $region12: #{kmeans_dist.1} parent=1 // pred_region
      _
    $region13: #{kmeans_dist.1} parent=1 // pred_fallthru
      _
    // Predicated region
    $region14: #{kmeans_dist.1} parent=1 // pred_check
      _
    $region15: #{kmeans_dist.1} parent=1 // pred_check_branch
      %38 = sbr.rel (0) target = $region17
    $region16: #{kmeans_dist.1} parent=1 // pred_region
      %39 = dma.done [#allocation4], 256
    $region17: #{kmeans_dist.1} parent=1 // pred_fallthru
      _
    // Predicated region
    $region18: #{kmeans_dist.1} parent=1 // pred_check
      _
    $region19: #{kmeans_dist.1} parent=1 // pred_check_branch
      %41 = sbr.rel (0) target = $region21
    $region20: #{kmeans_dist.1} parent=1 // pred_region
      %42 = dma.done [#allocation7], 512
    $region21: #{kmeans_dist.1} parent=1 // pred_fallthru
      _
    %p43 = scmp.eq.s32.totalorder 0, 0
    // Predicated region
    $region22: #{kmeans_dist.1} parent=1 // pred_check
      %p44 = pneg %p43
    $region23: #{kmeans_dist.1} parent=1 // pred_check_branch
      %46 = sbr.rel (%p44) target = $region25
    $region24: #{kmeans_dist.1} parent=1 // pred_region
      %v47 = vld [vmem:[#allocation3] sm:$0xff]
      %v48 = vld [vmem:[#allocation3 + $0x8] sm:$0xff]
      %v49 = vmul.f32 %v47, %v47
      %v50 = vmul.f32 %v48, %v48
      %vm51 = vcmask 261120
      %v52 = vsel %vm51, %v49, 0.0
      %53 = vadd.xlane.f32.xlu0 %v52
      %v54 = vpop.xlane.xlu0 %53
      %v55 = vsel %vm51, %v50, 0.0
      %56 = vadd.xlane.f32.xlu0 %v55
      %v57 = vpop.xlane.xlu0 %56
      %vm58 = vcmask 7168
      %59 = vst.msk [vmem:[#allocation2] sm:$0xff] %vm58, %v54
      %60 = vst.msk [vmem:[#allocation2 + $0x8] sm:$0xff] %vm58, %v57
    $region25: #{kmeans_dist.1} parent=1 // pred_fallthru
      _
    %v61 = vld [vmem:[#allocation3] sm:$0xff]
    %v62 = vld [vmem:[#allocation3 + $0x8] sm:$0xff]
    %v63 = vld [vmem:[#allocation6] sm:$0xff]
    %v64 = vld [vmem:[#allocation6 + $0x8] sm:$0xff]
    %v65 = vld [vmem:[#allocation6 + $0x10] sm:$0xff]
    %v66 = vld [vmem:[#allocation6 + $0x18] sm:$0xff]
    %vm67 = vcmask 261120
    %v69 = vsel %vm67, %v61, 0
    %v72 = vsel %vm67, %v62, 0
    %74 = vmatprep.subr.mxu0 0.0
    %75 = vmatpush1.msra.mxu0 %v63
    %76 = vmatprep.subr.mxu0 0.0
    %77 = vmatpush1.msra.mxu0 %v64
    %78 = vmatprep.subr.mxu0 0.0
    %79 = vmatpush1.msra.mxu0 %v65
    %80 = vmatprep.subr.mxu0 0.0
    %81 = vmatpush1.msra.mxu0 %v66
    %82 = vmatprep.subr.mxu0 0.0
    %83 = vmatpush1.msra.mxu0 0.0
    %84 = vmatprep.subr.mxu0 0.0
    %85 = vmatpush1.msra.mxu0 0.0
    %86 = vmatprep.subr.mxu0 0.0
    %87 = vmatpush1.msra.mxu0 0.0
    %88 = vmatprep.subr.mxu0 0.0
    %89 = vmatpush1.msra.mxu0 0.0
    %90 = vmatprep.subr.mxu0 0.0
    %91 = vmatpush1.msra.mxu0 0.0
    %92 = vmatprep.subr.mxu0 0.0
    %93 = vmatpush1.msra.mxu0 0.0
    %94 = vmatprep.subr.mxu0 0.0
    %95 = vmatpush1.msra.mxu0 0.0
    %96 = vmatprep.subr.mxu0 0.0
    %97 = vmatpush1.msra.mxu0 0.0
    %98 = vmatprep.subr.mxu0 0.0
    %99 = vmatpush1.msra.mxu0 0.0
    %100 = vmatprep.subr.mxu0 0.0
    %101 = vmatpush1.msra.mxu0 0.0
    %102 = vmatprep.subr.mxu0 0.0
    %103 = vmatpush1.msra.mxu0 0.0
    %104 = vmatprep.subr.mxu0 0.0
    %105 = vmatpush1.msra.mxu0 0.0
    %106 = vmatprep.subr.mxu0 0.0
    %107 = vmatpush1.msra.mxu0 0.0
    %108 = vmatprep.subr.mxu0 0.0
    %109 = vmatpush1.msra.mxu0 0.0
    %110 = vmatprep.subr.mxu0 0.0
    %111 = vmatpush1.msra.mxu0 0.0
    %112 = vmatprep.subr.mxu0 0.0
    %113 = vmatpush1.msra.mxu0 0.0
    %114 = vmatprep.subr.mxu0 0.0
    %115 = vmatpush1.msra.mxu0 0.0
    %116 = vmatprep.subr.mxu0 0.0
    %117 = vmatpush1.msra.mxu0 0.0
    %118 = vmatprep.subr.mxu0 0.0
    %119 = vmatpush1.msra.mxu0 0.0
    %120 = vmatprep.subr.mxu0 0.0
    %121 = vmatpush1.msra.mxu0 0.0
    %122 = vmatprep.subr.mxu0 0.0
    %123 = vmatpush1.msra.mxu0 0.0
    %124 = vmatprep.subr.mxu0 0.0
    %125 = vmatpush1.msra.mxu0 0.0
    %126 = vmatprep.subr.mxu0 0.0
    %127 = vmatpush1.msra.mxu0 0.0
    %128 = vmatprep.subr.mxu0 0.0
    %129 = vmatpush1.msra.mxu0 0.0
    %130 = vmatprep.subr.mxu0 0.0
    %131 = vmatpush1.msra.mxu0 0.0
    %132 = vmatprep.subr.mxu0 0.0
    %133 = vmatpush1.msra.mxu0 0.0
    %134 = vmatprep.subr.mxu0 0.0
    %135 = vmatpush1.msra.mxu0 0.0
    %136 = vmatprep.subr.mxu0 0.0
    %137 = vmatpush1.msra.mxu0 0.0
    %138 = vmatprep.mubr.f32.mxu0 0.0
    %139 = vmatmul.mubr.f32.gmra.mrb[0].mxu0 %v69
    %v140 = vpop.f32.mrb[0].mxu0
    %v141 = vadd.f32 0.0, %v140
    %v142 = vpop.f32.mrb[0].mxu0
    %143 = vmatprep.mubr.f32.mxu0 0.0
    %144 = vmatmul.mubr.f32.gmra.mrb[0].mxu0 %v72
    %v145 = vpop.f32.mrb[0].mxu0
    %v146 = vadd.f32 0.0, %v145
    %v147 = vpop.f32.mrb[0].mxu0
    %148 = vdwg.mxu0
    %v149 = vld [vmem:[#allocation2] sm:$0xff]
    %v150 = vld [vmem:[#allocation2 + $0x8] sm:$0xff]
    %v151 = vmul.f32 %v141, 2.0
    %v152 = vmul.f32 %v146, 2.0
    %154 = vset.pattern.permute.xlu0 0
    %155 = vperm.xlu0 %154, %v149
    %v156 = vpop.permute.xlu0 %155
    %159 = vset.pattern.permute.xlu0 0
    %160 = vperm.xlu0 %159, %v150
    %v161 = vpop.permute.xlu0 %160
    %v163 = vsub.f32 %v156, %v151
    %v164 = vsub.f32 %v161, %v152
    %v165 = vld [vmem:[%s2] sm:$0x1]
    %v167 = vlaneseq
    %v168 = vshrl.u32 %v167, 7
    %v169 = vsub.s32 0, %v168
    %v170 = vrot.slane %v165, %v169
    %v172 = vadd.f32 %v163, %v170
    %v173 = vadd.f32 %v164, %v170
    %174 = vst [vmem:[#allocation8] sm:$0xff] %v172
    %175 = vst [vmem:[#allocation8 + $0x8] sm:$0xff] %v173
    // Predicated region
    $region26: #{kmeans_dist.1} parent=1 // pred_check
      _
    $region27: #{kmeans_dist.1} parent=1 // pred_check_branch
      %177 = sbr.rel (0) target = $region29
    $region28: #{kmeans_dist.1} parent=1 // pred_region
      %s179 = ssub.s32 256, 256
      %180 = vsyncadd [#allocation5], %s179
      %s181 = sshll.u32 [#allocation8], 4
      %s182 = int_to_ptr.vmem [resolvable:$true] %s181
      %187 = dma.vmem_to_hbm [thread:$0]  %s182, 256, %s3, [#allocation5], 128, 128, 8
    $region29: #{kmeans_dist.1} parent=1 // pred_fallthru
      _
    // Predicated region
    $region30: #{kmeans_dist.1} parent=1 // pred_check
      _
    $region31: #{kmeans_dist.1} parent=1 // pred_check_branch
      %189 = sbr.rel (0) target = $region33
    $region32: #{kmeans_dist.1} parent=1 // pred_region
      %190 = dma.done [#allocation5], 256
    $region33: #{kmeans_dist.1} parent=1 // pred_fallthru
      _
    %191 = vsyncpa [#allocation4], 1
    %192 = vsyncpa [#allocation7], 1
    %193 = vsyncpa [#allocation5], 1

</llo_original>
